<compile_context>
chip_gen: v6e
topology: v6e:2x2x1
jax: 0.10.0
libtpu: 0.0.40
codegen_flags: <defaults>
</compile_context>

<pallas_src>
import jax
import jax.numpy as jnp
from jax.experimental import pallas as pl
from jax.experimental.pallas import tpu as pltpu


def _conv_kernel(x_ref, m_ref, o_ref):
    """x_ref: (B*OH, Kp)   height-im2col input slab (+1 bias column, zero padded) bf16
       m_ref: (Kp, OW*Cout) folded conv weights (+ bias row, zero padded)          bf16
       o_ref: (B*OH, OW*Cout) f32 output slab.
    The whole convolution is a single MXU matmul with f32 accumulation."""
    o_ref[...] = jnp.dot(x_ref[...], m_ref[...], preferred_element_type=jnp.float32)


def make_conv2_one_channel(weight, bias, *, times, height, width):
    """Returns a jitted forward(x) for Conv2OneChannel with the weight fold done once."""
    Cout, Cin, KH, KW = weight.shape
    pad = 1
    Hp, Wp = height + 2 * pad, width + 2 * pad
    OH = (height + 2 * pad - KH) // times + 1
    OW = (width + 2 * pad - KW) // times + 1
    # guard: gathered rows/cols must stay inside the padded image
    assert times * (OH - 1) + KH <= Hp and times * (OW - 1) + KW <= Wp

    K_raw = KH * Wp * Cin                       # real contraction length
    N = OW * Cout                               # output lane width
    Kp = ((K_raw + 1 + 127) // 128) * 128       # +1 bias column, padded to 128 lanes

    # ---- one-time weight fold: width-Toeplitz + Cin + KH all into one matmul block ----
    # m[(ky*Wp + w)*Cin + ci, ox*Cout + co] = sum_kx weight[co,ci,ky,kx] * [w == times*ox + kx]
    sel = (jnp.arange(Wp)[:, None, None]
           == times * jnp.arange(OW)[None, :, None] + jnp.arange(KW)[None, None, :]
           ).astype(jnp.float32)                                        # (Wp, OW, KW)
    m = jnp.einsum('wpx,oiyx->ywipo', sel, weight.astype(jnp.float32))  # (KH,Wp,Cin,OW,Cout)
    m = m.reshape(K_raw, N)
    bias_row = jnp.tile(bias.astype(jnp.float32), OW).reshape(1, N)     # bias folded in
    m_full = jnp.concatenate(
        [m, bias_row, jnp.zeros((Kp - K_raw - 1, N), jnp.float32)], axis=0
    ).astype(jnp.bfloat16)                                              # (Kp, N)

    # row gather indices for the height-im2col (tap ky of output row oy = times*oy + ky)
    row_idx = times * jnp.arange(OH)[:, None] + jnp.arange(KH)[None, :]  # (OH, KH)

    @jax.jit
    def forward(x):
        B, in_channels, H, W = x.shape
        if in_channels != Cin:
            raise ValueError('Input data channels is not equal model require')
        if (H, W) != (height, width):
            raise ValueError('Input spatial size does not match the folded weights')

        # ---- layout plumbing (wrapper side): NCHW -> padded NHWC -> height-im2col ----
        x_nhwc = jnp.transpose(x, (0, 2, 3, 1)).astype(jnp.float32)      # (B,H,W,Cin)
        x_pad = jnp.pad(x_nhwc, ((0, 0), (pad, pad), (pad, pad), (0, 0)))  # (B,Hp,Wp,Cin)
        x_rows = x_pad[:, row_idx]                                       # (B,OH,KH,Wp,Cin)
        x_im2col = x_rows.reshape(B * OH, K_raw)
        x_mat = jnp.concatenate(
            [x_im2col,
             jnp.ones((B * OH, 1), jnp.float32),                         # bias column
             jnp.zeros((B * OH, Kp - K_raw - 1), jnp.float32)], axis=1   # lane padding
        ).astype(jnp.bfloat16)                                           # (B*OH, Kp)

        out_slab = pl.pallas_call(
            _conv_kernel,
            out_shape=jax.ShapeDtypeStruct((B * OH, N), jnp.float32),
            in_specs=[pl.BlockSpec(memory_space=pltpu.MemorySpace.VMEM),
                      pl.BlockSpec(memory_space=pltpu.MemorySpace.VMEM)],
            out_specs=pl.BlockSpec(memory_space=pltpu.MemorySpace.VMEM),
        )(x_mat, m_full)

        # (B*OH, OW*Cout) -> (B, OH, OW, Cout) -> (B, Cout, OH, OW)
        return out_slab.reshape(B, OH, OW, Cout).transpose(0, 3, 1, 2).astype(x.dtype)

    return forward


if __name__ == "__main__":
    key = jax.random.PRNGKey(0)
    kx, kw, kb = jax.random.split(key, 3)
    B, Cin, H, W = 2, 4, 16, 16
    Cout, times = 8, 2

    x = jax.random.normal(kx, (B, Cin, H, W), jnp.float32)
    weight = jax.random.normal(kw, (Cout, Cin, 3, 3), jnp.float32) * 0.1
    bias = jax.random.normal(kb, (Cout,), jnp.float32) * 0.1

    forward = make_conv2_one_channel(weight, bias, times=times, height=H, width=W)
    out = forward(x)
    out = jax.block_until_ready(out)

    ref = jax.lax.conv_general_dilated(
        x, weight, window_strides=(times, times), padding=((1, 1), (1, 1)),
        dimension_numbers=('NCHW', 'OIHW', 'NCHW')) + bias[None, :, None, None]

    assert out.shape == (B, Cout, H // times, W // times), out.shape
    # bf16 MXU inputs with f32 accumulation (same pass the default-precision f32 dot
    # used) -> compare against the f32 reference with a modest tolerance.
    assert jnp.allclose(out, ref, atol=2e-2, rtol=2e-2), float(jnp.max(jnp.abs(out - ref)))
    print("KERNEL_OK")
</pallas_src>

<mosaic_0001>
module attributes {stable_mosaic.version = 11 : i64} {
  func.func @_conv_kernel(%arg0: memref<16x256xbf16, #tpu.memory_space<vmem>>, %arg1: memref<256x64xbf16, #tpu.memory_space<vmem>>, %arg2: memref<16x64xf32, #tpu.memory_space<vmem>>) attributes {dimension_semantics = [], scalar_prefetch = 0 : i64, scratch_operands = 0 : i64, tpu.core_type = #tpu.core_type<tc>} {
    %c0 = arith.constant 0 : index
    %c0_0 = arith.constant 0 : index
    %0 = vector.load %arg0[%c0, %c0_0] : memref<16x256xbf16, #tpu.memory_space<vmem>>, vector<16x256xbf16>
    %c0_1 = arith.constant 0 : index
    %c0_2 = arith.constant 0 : index
    %1 = vector.load %arg1[%c0_1, %c0_2] : memref<256x64xbf16, #tpu.memory_space<vmem>>, vector<256x64xbf16>
    %cst = arith.constant dense<0.000000e+00> : vector<16x64xf32>
    %2 = tpu.matmul %0, %1, %cst {dimension_numbers = #tpu.dot_dimension_numbers<[1], [0], [0], [1], [0, 0, 1, 1], [], []>} : vector<16x256xbf16>, vector<256x64xbf16>, vector<16x64xf32> -> vector<16x64xf32>
    %c0_3 = arith.constant 0 : index
    %c0_4 = arith.constant 0 : index
    %3 = vector.load %arg2[%c0_3, %c0_4] : memref<16x64xf32, #tpu.memory_space<vmem>>, vector<16x64xf32>
    tpu.vector_store %arg2[%c0_3, %c0_4], %2 {strides = array<i32>} : memref<16x64xf32, #tpu.memory_space<vmem>>, vector<16x64xf32>,
    return
  }
}

</mosaic_0001>

<llo_original>
// kernel: forward.1
$region0: #{forward.1}
  #allocation0 [shape = 'u32[]', space=smem, size = 0x4, offset = 0x4, fixed_abs, tag = 'smem constant byte address 0x4 - core index']
  #allocation1 [shape = 'u32[144,128]{1,0:T(1,128)}', space=vmem, size = 0x12000, scoped, tag = 'internal scratch']
  %s0 = inlined_call_operand.vmem [shape: bf16[16,256], index: 0, kind: input, shape index: {}]
  %s1 = inlined_call_operand.vmem [shape: bf16[256,64], index: 1, kind: input, shape index: {}]
  %s2 = inlined_call_operand.vmem [shape: f32[16,64], index: 2, kind: output, shape index: {}]
  %s3 = sld [smem:[#allocation0]]
  $region18: #{forward.1} parent=0
    _
  %s5 = ssub.s32 1, %s3
  %s6 = scalar_select 0, %s5, %s3
  // Predicated region
  $region2: #{forward.1} parent=0 // pred_check
    _
  $region3: #{forward.1} parent=0 // pred_check_branch
    %8 = sbr.rel (0) target = $region5
  $region4: #{forward.1} parent=0 // pred_region
    _
  $region5: #{forward.1} parent=0 // pred_fallthru
    _
  // Predicated region
  $region6: #{forward.1} parent=0 // pred_check
    _
  $region7: #{forward.1} parent=0 // pred_check_branch
    %10 = sbr.rel (0) target = $region9
  $region8: #{forward.1} parent=0 // pred_region
    _
  $region9: #{forward.1} parent=0 // pred_fallthru
    _
  %v12 = vld [vmem:[%s0] sm:$0xff]
  %v13 = vld [vmem:[%s0 + $0x8] sm:$0xff]
  %v14 = vld [vmem:[%s1] sm:$0xf]
  %v15 = vld [vmem:[%s1 + $0x4] sm:$0xf]
  %v16 = vld [vmem:[%s1 + $0x8] sm:$0xf]
  %v17 = vld [vmem:[%s1 + $0xc] sm:$0xf]
  %v18 = vld [vmem:[%s1 + $0x10] sm:$0xf]
  %v19 = vld [vmem:[%s1 + $0x14] sm:$0xf]
  %v20 = vld [vmem:[%s1 + $0x18] sm:$0xf]
  %v21 = vld [vmem:[%s1 + $0x1c] sm:$0xf]
  %v22 = vld [vmem:[%s1 + $0x20] sm:$0xf]
  %v23 = vld [vmem:[%s1 + $0x24] sm:$0xf]
  %v24 = vld [vmem:[%s1 + $0x28] sm:$0xf]
  %v25 = vld [vmem:[%s1 + $0x2c] sm:$0xf]
  %v26 = vld [vmem:[%s1 + $0x30] sm:$0xf]
  %v27 = vld [vmem:[%s1 + $0x34] sm:$0xf]
  %v28 = vld [vmem:[%s1 + $0x38] sm:$0xf]
  %v29 = vld [vmem:[%s1 + $0x3c] sm:$0xf]
  %v30 = vld [vmem:[%s1 + $0x40] sm:$0xf]
  %v31 = vld [vmem:[%s1 + $0x44] sm:$0xf]
  %v32 = vld [vmem:[%s1 + $0x48] sm:$0xf]
  %v33 = vld [vmem:[%s1 + $0x4c] sm:$0xf]
  %v34 = vld [vmem:[%s1 + $0x50] sm:$0xf]
  %v35 = vld [vmem:[%s1 + $0x54] sm:$0xf]
  %v36 = vld [vmem:[%s1 + $0x58] sm:$0xf]
  %v37 = vld [vmem:[%s1 + $0x5c] sm:$0xf]
  %v38 = vld [vmem:[%s1 + $0x60] sm:$0xf]
  %v39 = vld [vmem:[%s1 + $0x64] sm:$0xf]
  %v40 = vld [vmem:[%s1 + $0x68] sm:$0xf]
  %v41 = vld [vmem:[%s1 + $0x6c] sm:$0xf]
  %v42 = vld [vmem:[%s1 + $0x70] sm:$0xf]
  %v43 = vld [vmem:[%s1 + $0x74] sm:$0xf]
  %v44 = vld [vmem:[%s1 + $0x78] sm:$0xf]
  %v45 = vld [vmem:[%s1 + $0x7c] sm:$0xf]
  %v48 = vunpack.c.l.b16 %v12
  %v49 = vunpack.c.h.b16 %v12
  %v50 = vunpack.c.l.b16 %v13
  %v51 = vunpack.c.h.b16 %v13
  %v52 = vpack.c.b16 %v50, %v48
  %v53 = vpack.c.b16 %v51, %v49
  %v88 = vunpack.c.l.b16 %v14
  %v89 = vunpack.c.l.b16 %v15
  %v90 = vunpack.c.l.b16 %v16
  %v91 = vunpack.c.l.b16 %v17
  %v92 = vunpack.c.l.b16 %v18
  %v93 = vunpack.c.l.b16 %v19
  %v94 = vunpack.c.l.b16 %v20
  %v95 = vunpack.c.l.b16 %v21
  %v96 = vunpack.c.l.b16 %v22
  %v97 = vunpack.c.l.b16 %v23
  %v98 = vunpack.c.l.b16 %v24
  %v99 = vunpack.c.l.b16 %v25
  %v100 = vunpack.c.l.b16 %v26
  %v101 = vunpack.c.l.b16 %v27
  %v102 = vunpack.c.l.b16 %v28
  %v103 = vunpack.c.l.b16 %v29
  %v104 = vunpack.c.l.b16 %v30
  %v105 = vunpack.c.l.b16 %v31
  %v106 = vunpack.c.l.b16 %v32
  %v107 = vunpack.c.l.b16 %v33
  %v108 = vunpack.c.l.b16 %v34
  %v109 = vunpack.c.l.b16 %v35
  %v110 = vunpack.c.l.b16 %v36
  %v111 = vunpack.c.l.b16 %v37
  %v112 = vunpack.c.l.b16 %v38
  %v113 = vunpack.c.l.b16 %v39
  %v114 = vunpack.c.l.b16 %v40
  %v115 = vunpack.c.l.b16 %v41
  %v116 = vunpack.c.l.b16 %v42
  %v117 = vunpack.c.l.b16 %v43
  %v118 = vunpack.c.l.b16 %v44
  %v119 = vunpack.c.l.b16 %v45
  %v120 = vpack.c.b16 %v89, %v88
  %v121 = vpack.c.b16 %v91, %v90
  %v122 = vpack.c.b16 %v93, %v92
  %v123 = vpack.c.b16 %v95, %v94
  %v124 = vpack.c.b16 %v97, %v96
  %v125 = vpack.c.b16 %v99, %v98
  %v126 = vpack.c.b16 %v101, %v100
  %v127 = vpack.c.b16 %v103, %v102
  %v128 = vpack.c.b16 %v105, %v104
  %v129 = vpack.c.b16 %v107, %v106
  %v130 = vpack.c.b16 %v109, %v108
  %v131 = vpack.c.b16 %v111, %v110
  %v132 = vpack.c.b16 %v113, %v112
  %v133 = vpack.c.b16 %v115, %v114
  %v134 = vpack.c.b16 %v117, %v116
  %v135 = vpack.c.b16 %v119, %v118
  %152 = vmatprep.subr.bf16.mxu0 0
  %153 = vmatpush1.bf16.msra.mxu0 %v127
  %154 = vmatprep.subr.bf16.mxu0 0
  %155 = vmatpush1.bf16.msra.mxu0 %v126
  %156 = vmatprep.subr.bf16.mxu0 0
  %157 = vmatpush1.bf16.msra.mxu0 %v125
  %158 = vmatprep.subr.bf16.mxu0 0
  %159 = vmatpush1.bf16.msra.mxu0 %v124
  %160 = vmatprep.subr.bf16.mxu0 0
  %161 = vmatpush1.bf16.msra.mxu0 %v123
  %162 = vmatprep.subr.bf16.mxu0 0
  %163 = vmatpush1.bf16.msra.mxu0 %v122
  %164 = vmatprep.subr.bf16.mxu0 0
  %165 = vmatpush1.bf16.msra.mxu0 %v121
  %166 = vmatprep.subr.bf16.mxu0 0
  %167 = vmatpush1.bf16.msra.mxu0 %v120
  %168 = vmatprep.subr.bf16.mxu0 0
  %169 = vmatpush2.bf16.msra.mxu0 %v135
  %170 = vmatprep.subr.bf16.mxu0 0
  %171 = vmatpush2.bf16.msra.mxu0 %v134
  %172 = vmatprep.subr.bf16.mxu0 0
  %173 = vmatpush2.bf16.msra.mxu0 %v133
  %174 = vmatprep.subr.bf16.mxu0 0
  %175 = vmatpush2.bf16.msra.mxu0 %v132
  %176 = vmatprep.subr.bf16.mxu0 0
  %177 = vmatpush2.bf16.msra.mxu0 %v131
  %178 = vmatprep.subr.bf16.mxu0 0
  %179 = vmatpush2.bf16.msra.mxu0 %v130
  %180 = vmatprep.subr.bf16.mxu0 0
  %181 = vmatpush2.bf16.msra.mxu0 %v129
  %182 = vmatprep.subr.bf16.mxu0 0
  %183 = vmatpush2.bf16.msra.mxu0 %v128
  %184 = vmatprep.mubr.bf16.mxu0 %v53
  %185 = vmatmul.mubr.bf16.gmra.mxu0 %v52
  %v186 = vpop.f32.mrf.mxu0
  %v187 = vadd.f32 0.0, %v186
  %v188 = vpop.f32.mrf.mxu0
  %v189 = vpop.f32.mrf.mxu0
  %v190 = vadd.f32 0.0, %v189
  %v191 = vpop.f32.mrf.mxu0
  %192 = vdwg.mxu0
  %vm193 = vcmask 523264
  %194 = vst.msk [vmem:[%s2] sm:$0xff] %vm193, %v187
  %195 = vst.msk [vmem:[%s2 + $0x8] sm:$0xff] %vm193, %v190
  // Predicated region
  $region10: #{forward.1} parent=0 // pred_check
    _
  $region11: #{forward.1} parent=0 // pred_check_branch
    %197 = sbr.rel (0) target = $region13
  $region12: #{forward.1} parent=0 // pred_region
    _
  $region13: #{forward.1} parent=0 // pred_fallthru
    _
  // Predicated region
  $region14: #{forward.1} parent=0 // pred_check
    _
  $region15: #{forward.1} parent=0 // pred_check_branch
    %199 = sbr.rel (0) target = $region17
  $region16: #{forward.1} parent=0 // pred_region
    _
  $region17: #{forward.1} parent=0 // pred_fallthru
    _

</llo_original>
